<compile_context>
chip_gen: v7x
topology: tpu7x:2x2x1
jax: 0.10.0
libtpu: 0.0.40
codegen_flags: <defaults>
</compile_context>

<pallas_src>
import functools

import jax
import jax.numpy as jnp
from jax.experimental import pallas as pl
from jax.experimental.pallas import tpu as pltpu


def _round_up(x, m):
    return ((x + m - 1) // m) * m


def _mlp_kernel(x_ref, w1_ref, b1_ref, w2_ref, b2_ref, w3_ref, b3_ref, o_ref):
    x = x_ref[...]
    n_states = x.shape[-1]

    # Layer 1: relu(x @ W1 + b1).  For tiny K (typical DQN state dims) a
    # (tb, K) @ (K, H) MXU push wastes rows and can force a relayout of the
    # lane-sparse x tile; K broadcasted VPU FMAs are effectively free here.
    if n_states <= 8:
        h1 = x[:, 0:1] * w1_ref[0:1, :] + b1_ref[...]
        for k in range(1, n_states):
            h1 = h1 + x[:, k : k + 1] * w1_ref[k : k + 1, :]
    else:
        h1 = jnp.dot(x, w1_ref[...], preferred_element_type=jnp.float32) + b1_ref[...]
    h1 = jnp.maximum(h1, 0.0)

    # Layer 2: relu(h1 @ W2 + b2)
    h2 = jnp.dot(h1, w2_ref[...], preferred_element_type=jnp.float32)
    h2 = jnp.maximum(h2 + b2_ref[...], 0.0)

    # Layer 3 head: W3/b3 are lane-padded to 128 columns (clean MXU shape),
    # but only the real n_actions columns are stored -> un-padded HBM writeback.
    out = jnp.dot(h2, w3_ref[...], preferred_element_type=jnp.float32) + b3_ref[...]
    n_actions = o_ref.shape[-1]
    o_ref[...] = out[:, :n_actions].astype(o_ref.dtype)


def prepare_params(params):
    """One-time prep (call OUTSIDE the training/inference loop): lane-pad the
    output head (w3/b3) to a multiple of 128 so each forward does not pay two
    extra XLA pad ops before the pallas_call.  Returns (padded_params, n_actions)."""
    w3, b3 = params["w3"], params["b3"]
    hidden, n_actions = w3.shape
    n_pad = max(_round_up(n_actions, 128), 128)
    if n_pad != n_actions:
        w3 = jnp.zeros((hidden, n_pad), w3.dtype).at[:, :n_actions].set(w3)
        b3 = jnp.zeros((1, n_pad), b3.dtype).at[:, :n_actions].set(b3)
    prepared = dict(params)
    prepared["w3"], prepared["b3"] = w3, b3
    return prepared, n_actions


@functools.partial(jax.jit, static_argnames=("n_actions", "block_b"))
def mlp_forward(x, params, *, n_actions, block_b=4096):
    """x: (B, n_states) f32; params: dict from prepare_params (w3/b3 lane-padded)."""
    w1, b1 = params["w1"], params["b1"]
    w2, b2 = params["w2"], params["b2"]
    w3, b3 = params["w3"], params["b3"]  # lane-padded to a multiple of 128 cols

    B, n_states = x.shape
    H = w1.shape[1]
    n_pad = w3.shape[1]

    # --- batch tiling ---
    # Large tiles amortize the fixed per-grid-step overhead (kernel is
    # DMA/overhead-bound).  Once B is large, cap the tile so the grid has
    # >= 2 steps and both v7x TensorCores participate ("parallel" axis).
    tb = min(block_b, _round_up(B, 8))
    if B > 2048:
        tb = min(tb, _round_up(pl.cdiv(B, 2), 8))
    tb = _round_up(tb, 8)
    b_padded = _round_up(B, tb)
    if b_padded != B:
        x_in = jnp.zeros((b_padded, n_states), x.dtype).at[:B, :].set(x)
    else:
        x_in = x
    grid = (b_padded // tb,)

    const = lambda i: (0, 0)  # weights/biases: same block every step -> stay resident

    flops = 2 * b_padded * (n_states * H + H * H + H * n_pad)
    bytes_accessed = (
        x_in.size * x_in.dtype.itemsize
        + sum(a.size * a.dtype.itemsize for a in (w1, b1, w2, b2, w3, b3))
        + b_padded * n_actions * 4
    )

    out = pl.pallas_call(
        _mlp_kernel,
        out_shape=jax.ShapeDtypeStruct((b_padded, n_actions), jnp.float32),
        grid=grid,
        in_specs=[
            pl.BlockSpec((tb, n_states), lambda i: (i, 0)),
            pl.BlockSpec(w1.shape, const),
            pl.BlockSpec(b1.shape, const),
            pl.BlockSpec(w2.shape, const),
            pl.BlockSpec(b2.shape, const),
            pl.BlockSpec(w3.shape, const),
            pl.BlockSpec(b3.shape, const),
        ],
        # Block last dim == full array last dim (n_actions) -> legal BlockSpec,
        # and the HBM writeback is the true (B, n_actions) size, not 128-padded.
        out_specs=pl.BlockSpec((tb, n_actions), lambda i: (i, 0)),
        compiler_params=pltpu.CompilerParams(
            dimension_semantics=("parallel",),
            vmem_limit_bytes=32 << 20,  # safe on v5e/v6e (128 MiB) and v7x (64 MiB)
        ),
        cost_estimate=pl.CostEstimate(
            flops=flops, transcendentals=0, bytes_accessed=bytes_accessed
        ),
    )(x_in, w1, b1, w2, b2, w3, b3)

    return out[:B]


def init_params(key, n_states, n_actions, hidden_dim=128):
    """Deterministic init mimicking nn.Linear default (U[-1/sqrt(fan_in), +])."""
    ks = jax.random.split(key, 6)

    def linear(kw, kb, fan_in, fan_out):
        bound = 1.0 / jnp.sqrt(fan_in)
        w = jax.random.uniform(kw, (fan_in, fan_out), jnp.float32, -bound, bound)
        b = jax.random.uniform(kb, (1, fan_out), jnp.float32, -bound, bound)
        return w, b

    w1, b1 = linear(ks[0], ks[1], n_states, hidden_dim)
    w2, b2 = linear(ks[2], ks[3], hidden_dim, hidden_dim)
    w3, b3 = linear(ks[4], ks[5], hidden_dim, n_actions)
    return {"w1": w1, "b1": b1, "w2": w2, "b2": b2, "w3": w3, "b3": b3}


def mlp_reference(x, p):
    h1 = jnp.maximum(x @ p["w1"] + p["b1"], 0.0)
    h2 = jnp.maximum(h1 @ p["w2"] + p["b2"], 0.0)
    return h2 @ p["w3"] + p["b3"]


if __name__ == "__main__":
    key = jax.random.PRNGKey(0)
    n_states, n_actions, hidden_dim = 4, 2, 128

    pkey, xkey, xkey2 = jax.random.split(key, 3)
    params = init_params(pkey, n_states, n_actions, hidden_dim)
    # One-time weight prep, hoisted out of the per-call jit.
    prepared, n_act = prepare_params(params)

    # Small batch (single tile, rows padded to 8 sublanes).
    batch = 8
    x = jax.random.normal(xkey, (batch, n_states), jnp.float32)
    out = mlp_forward(x, prepared, n_actions=n_act)
    jax.block_until_ready(out)
    ref = mlp_reference(x, params)
    assert out.shape == (batch, n_actions)
    assert jnp.allclose(out, ref, atol=1e-4, rtol=1e-4), "mismatch vs reference (B=8)"

    # Non-multiple batch exercising the multi-tile grid + batch-padding path.
    batch2 = 300
    x2 = jax.random.normal(xkey2, (batch2, n_states), jnp.float32)
    out2 = mlp_forward(x2, prepared, n_actions=n_act, block_b=128)
    jax.block_until_ready(out2)
    ref2 = mlp_reference(x2, params)
    assert out2.shape == (batch2, n_actions)
    assert jnp.allclose(out2, ref2, atol=1e-4, rtol=1e-4), "mismatch vs reference (B=300)"

    print("KERNEL_OK")
</pallas_src>

<mosaic_0001>
module attributes {stable_mosaic.version = 11 : i64} {
  func.func @_mlp_kernel(%arg0: i32, %arg1: memref<8x4xf32, #tpu.memory_space<vmem>>, %arg2: memref<4x128xf32, #tpu.memory_space<vmem>>, %arg3: memref<1x128xf32, #tpu.memory_space<vmem>>, %arg4: memref<128x128xf32, #tpu.memory_space<vmem>>, %arg5: memref<1x128xf32, #tpu.memory_space<vmem>>, %arg6: memref<128x128xf32, #tpu.memory_space<vmem>>, %arg7: memref<1x128xf32, #tpu.memory_space<vmem>>, %arg8: memref<8x2xf32, #tpu.memory_space<vmem>>) attributes {dimension_semantics = [#tpu.dimension_semantics<parallel>], iteration_bounds = array<i64: 1>, scalar_prefetch = 0 : i64, scratch_operands = 0 : i64, tpu.core_type = #tpu.core_type<tc>, window_params = [{transform_indices = @transform_0, window_bounds = array<i64: 8, 4>}, {pipeline_mode = #tpu.pipeline_mode<synchronous>, transform_indices = @transform_1, window_bounds = array<i64: 4, 128>}, {pipeline_mode = #tpu.pipeline_mode<synchronous>, transform_indices = @transform_2, window_bounds = array<i64: 1, 128>}, {pipeline_mode = #tpu.pipeline_mode<synchronous>, transform_indices = @transform_3, window_bounds = array<i64: 128, 128>}, {pipeline_mode = #tpu.pipeline_mode<synchronous>, transform_indices = @transform_4, window_bounds = array<i64: 1, 128>}, {pipeline_mode = #tpu.pipeline_mode<synchronous>, transform_indices = @transform_5, window_bounds = array<i64: 128, 128>}, {pipeline_mode = #tpu.pipeline_mode<synchronous>, transform_indices = @transform_6, window_bounds = array<i64: 1, 128>}, {transform_indices = @transform_7, window_bounds = array<i64: 8, 2>}]} {
    %c0 = arith.constant 0 : index
    %c0_0 = arith.constant 0 : index
    %0 = vector.load %arg1[%c0, %c0_0] : memref<8x4xf32, #tpu.memory_space<vmem>>, vector<8x4xf32>
    %1 = vector.extract_strided_slice %0 {offsets = [0, 0], sizes = [8, 1], strides = [1, 1]} : vector<8x4xf32> to vector<8x1xf32>
    %c0_1 = arith.constant 0 : index
    %c0_2 = arith.constant 0 : index
    %2 = vector.load %arg2[%c0_1, %c0_2] : memref<4x128xf32, #tpu.memory_space<vmem>>, vector<1x128xf32>
    %3 = vector.broadcast %1 : vector<8x1xf32> to vector<8x128xf32>
    %4 = vector.broadcast %2 : vector<1x128xf32> to vector<8x128xf32>
    %5 = arith.mulf %3, %4 : vector<8x128xf32>
    %c0_3 = arith.constant 0 : index
    %c0_4 = arith.constant 0 : index
    %6 = vector.load %arg3[%c0_3, %c0_4] : memref<1x128xf32, #tpu.memory_space<vmem>>, vector<1x128xf32>
    %7 = vector.broadcast %6 : vector<1x128xf32> to vector<8x128xf32>
    %8 = arith.addf %5, %7 : vector<8x128xf32>
    %9 = vector.extract_strided_slice %0 {offsets = [0, 1], sizes = [8, 1], strides = [1, 1]} : vector<8x4xf32> to vector<8x1xf32>
    %c1 = arith.constant 1 : index
    %c0_5 = arith.constant 0 : index
    %10 = vector.load %arg2[%c1, %c0_5] : memref<4x128xf32, #tpu.memory_space<vmem>>, vector<1x128xf32>
    %11 = vector.broadcast %9 : vector<8x1xf32> to vector<8x128xf32>
    %12 = vector.broadcast %10 : vector<1x128xf32> to vector<8x128xf32>
    %13 = arith.mulf %11, %12 : vector<8x128xf32>
    %14 = arith.addf %8, %13 : vector<8x128xf32>
    %15 = vector.extract_strided_slice %0 {offsets = [0, 2], sizes = [8, 1], strides = [1, 1]} : vector<8x4xf32> to vector<8x1xf32>
    %c2 = arith.constant 2 : index
    %c0_6 = arith.constant 0 : index
    %16 = vector.load %arg2[%c2, %c0_6] : memref<4x128xf32, #tpu.memory_space<vmem>>, vector<1x128xf32>
    %17 = vector.broadcast %15 : vector<8x1xf32> to vector<8x128xf32>
    %18 = vector.broadcast %16 : vector<1x128xf32> to vector<8x128xf32>
    %19 = arith.mulf %17, %18 : vector<8x128xf32>
    %20 = arith.addf %14, %19 : vector<8x128xf32>
    %21 = vector.extract_strided_slice %0 {offsets = [0, 3], sizes = [8, 1], strides = [1, 1]} : vector<8x4xf32> to vector<8x1xf32>
    %c3 = arith.constant 3 : index
    %c0_7 = arith.constant 0 : index
    %22 = vector.load %arg2[%c3, %c0_7] : memref<4x128xf32, #tpu.memory_space<vmem>>, vector<1x128xf32>
    %23 = vector.broadcast %21 : vector<8x1xf32> to vector<8x128xf32>
    %24 = vector.broadcast %22 : vector<1x128xf32> to vector<8x128xf32>
    %25 = arith.mulf %23, %24 : vector<8x128xf32>
    %26 = arith.addf %20, %25 : vector<8x128xf32>
    %cst = arith.constant 0.000000e+00 : f32
    %27 = vector.broadcast %cst : f32 to vector<8x128xf32>
    %28 = arith.maximumf %26, %27 : vector<8x128xf32>
    %c0_8 = arith.constant 0 : index
    %c0_9 = arith.constant 0 : index
    %29 = vector.load %arg4[%c0_8, %c0_9] : memref<128x128xf32, #tpu.memory_space<vmem>>, vector<128x128xf32>
    %cst_10 = arith.constant dense<0.000000e+00> : vector<8x128xf32>
    %30 = tpu.matmul %28, %29, %cst_10 {dimension_numbers = #tpu.dot_dimension_numbers<[1], [0], [0], [1], [0, 0, 1, 1], [], []>} : vector<8x128xf32>, vector<128x128xf32>, vector<8x128xf32> -> vector<8x128xf32>
    %c0_11 = arith.constant 0 : index
    %c0_12 = arith.constant 0 : index
    %31 = vector.load %arg5[%c0_11, %c0_12] : memref<1x128xf32, #tpu.memory_space<vmem>>, vector<1x128xf32>
    %32 = vector.broadcast %31 : vector<1x128xf32> to vector<8x128xf32>
    %33 = arith.addf %30, %32 : vector<8x128xf32>
    %cst_13 = arith.constant 0.000000e+00 : f32
    %34 = vector.broadcast %cst_13 : f32 to vector<8x128xf32>
    %35 = arith.maximumf %33, %34 : vector<8x128xf32>
    %c0_14 = arith.constant 0 : index
    %c0_15 = arith.constant 0 : index
    %36 = vector.load %arg6[%c0_14, %c0_15] : memref<128x128xf32, #tpu.memory_space<vmem>>, vector<128x128xf32>
    %cst_16 = arith.constant dense<0.000000e+00> : vector<8x128xf32>
    %37 = tpu.matmul %35, %36, %cst_16 {dimension_numbers = #tpu.dot_dimension_numbers<[1], [0], [0], [1], [0, 0, 1, 1], [], []>} : vector<8x128xf32>, vector<128x128xf32>, vector<8x128xf32> -> vector<8x128xf32>
    %c0_17 = arith.constant 0 : index
    %c0_18 = arith.constant 0 : index
    %38 = vector.load %arg7[%c0_17, %c0_18] : memref<1x128xf32, #tpu.memory_space<vmem>>, vector<1x128xf32>
    %39 = vector.broadcast %38 : vector<1x128xf32> to vector<8x128xf32>
    %40 = arith.addf %37, %39 : vector<8x128xf32>
    %41 = vector.extract_strided_slice %40 {offsets = [0, 0], sizes = [8, 2], strides = [1, 1]} : vector<8x128xf32> to vector<8x2xf32>
    %c0_19 = arith.constant 0 : index
    %c0_20 = arith.constant 0 : index
    %42 = vector.load %arg8[%c0_19, %c0_20] : memref<8x2xf32, #tpu.memory_space<vmem>>, vector<8x2xf32>
    tpu.vector_store %arg8[%c0_19, %c0_20], %41 {strides = array<i32>} : memref<8x2xf32, #tpu.memory_space<vmem>>, vector<8x2xf32>,
    return
  }
  func.func @transform_0(%arg0: i32) -> (i32, i32) {
    %c0_i32 = arith.constant 0 : i32
    %c0_i32_0 = arith.constant 0 : i32
    return %arg0, %c0_i32 : i32, i32
  }
  func.func @transform_1(%arg0: i32) -> (i32, i32) {
    %c0_i32 = arith.constant 0 : i32
    %c0_i32_0 = arith.constant 0 : i32
    %c0_i32_1 = arith.constant 0 : i32
    return %c0_i32, %c0_i32_0 : i32, i32
  }
  func.func @transform_2(%arg0: i32) -> (i32, i32) {
    %c0_i32 = arith.constant 0 : i32
    %c0_i32_0 = arith.constant 0 : i32
    %c0_i32_1 = arith.constant 0 : i32
    return %c0_i32, %c0_i32_0 : i32, i32
  }
  func.func @transform_3(%arg0: i32) -> (i32, i32) {
    %c0_i32 = arith.constant 0 : i32
    %c0_i32_0 = arith.constant 0 : i32
    %c0_i32_1 = arith.constant 0 : i32
    return %c0_i32, %c0_i32_0 : i32, i32
  }
  func.func @transform_4(%arg0: i32) -> (i32, i32) {
    %c0_i32 = arith.constant 0 : i32
    %c0_i32_0 = arith.constant 0 : i32
    %c0_i32_1 = arith.constant 0 : i32
    return %c0_i32, %c0_i32_0 : i32, i32
  }
  func.func @transform_5(%arg0: i32) -> (i32, i32) {
    %c0_i32 = arith.constant 0 : i32
    %c0_i32_0 = arith.constant 0 : i32
    %c0_i32_1 = arith.constant 0 : i32
    return %c0_i32, %c0_i32_0 : i32, i32
  }
  func.func @transform_6(%arg0: i32) -> (i32, i32) {
    %c0_i32 = arith.constant 0 : i32
    %c0_i32_0 = arith.constant 0 : i32
    %c0_i32_1 = arith.constant 0 : i32
    return %c0_i32, %c0_i32_0 : i32, i32
  }
  func.func @transform_7(%arg0: i32) -> (i32, i32) {
    %c0_i32 = arith.constant 0 : i32
    %c0_i32_0 = arith.constant 0 : i32
    return %arg0, %c0_i32 : i32, i32
  }
}

</mosaic_0001>

<llo_original>
// kernel: mlp_forward.1
$region0: #{mlp_forward.1}
  #allocation0 [shape = 'u32[]', space=smem, size = 0x4, offset = 0x4, fixed_abs, tag = 'smem constant byte address 0x4 - core index']
  #allocation1 [shape = 'u32[144,128]{1,0:T(1,128)}', space=vmem, size = 0x12000, scoped, tag = 'internal scratch']
  %s0 = inlined_call_operand.vmem [shape: f32[8,4], index: 0, kind: input, shape index: {}]
  %s1 = inlined_call_operand.vmem [shape: f32[4,128], index: 1, kind: input, shape index: {}]
  %s2 = inlined_call_operand.vmem [shape: f32[1,128], index: 2, kind: input, shape index: {}]
  %s3 = inlined_call_operand.hbm [shape: f32[128,128], index: 3, kind: input, shape index: {}]
  %s4 = inlined_call_operand.vmem [shape: f32[1,128], index: 4, kind: input, shape index: {}]
  %s5 = inlined_call_operand.hbm [shape: f32[128,128], index: 5, kind: input, shape index: {}]
  %s6 = inlined_call_operand.vmem [shape: f32[1,128], index: 6, kind: input, shape index: {}]
  %s7 = inlined_call_operand.vmem [shape: f32[8,2], index: 7, kind: output, shape index: {}]
  %s8 = sld [smem:[#allocation0]]
  $region46: #{mlp_forward.1} parent=0
    _
  %s10 = ssub.s32 1, %s8
  %s11 = scalar_select 0, %s10, %s8
  $region1: #{mlp_forward.1} parent=0
    #allocation2 [shape = 'u8[65536]{0}', space=vmem, size = 0x10000, scoped, tag = 'input window, operand 3, single buffered']
    #allocation3 [shape = 's32[1]{0}', space=sflag, size = 0x4, scoped, tag = 'scoped memory for mlp_forward.1']
    #allocation4 [shape = 'u8[65536]{0}', space=vmem, size = 0x10000, scoped, tag = 'input window, operand 5, single buffered']
    #allocation5 [shape = 's32[1]{0}', space=sflag, size = 0x4, scoped, tag = 'scoped memory for mlp_forward.1']
    %12 = vsyncpa [#allocation3], 0
    %13 = vsyncpa [#allocation5], 0
    // Predicated region
    $region2: #{mlp_forward.1} parent=1 // pred_check
      _
    $region3: #{mlp_forward.1} parent=1 // pred_check_branch
      %15 = sbr.rel (0) target = $region5
    $region4: #{mlp_forward.1} parent=1 // pred_region
      _
    $region5: #{mlp_forward.1} parent=1 // pred_fallthru
      _
    // Predicated region
    $region6: #{mlp_forward.1} parent=1 // pred_check
      _
    $region7: #{mlp_forward.1} parent=1 // pred_check_branch
      %17 = sbr.rel (0) target = $region9
    $region8: #{mlp_forward.1} parent=1 // pred_region
      _
    $region9: #{mlp_forward.1} parent=1 // pred_fallthru
      _
    // Predicated region
    $region10: #{mlp_forward.1} parent=1 // pred_check
      _
    $region11: #{mlp_forward.1} parent=1 // pred_check_branch
      %19 = sbr.rel (0) target = $region13
    $region12: #{mlp_forward.1} parent=1 // pred_region
      _
    $region13: #{mlp_forward.1} parent=1 // pred_fallthru
      _
    // Predicated region
    $region14: #{mlp_forward.1} parent=1 // pred_check
      _
    $region15: #{mlp_forward.1} parent=1 // pred_check_branch
      %21 = sbr.rel (0) target = $region17
    $region16: #{mlp_forward.1} parent=1 // pred_region
      %s23 = ssub.s32 2048, 2048
      %24 = vsyncadd [#allocation3], %s23
      %s25 = sshll.u32 [#allocation2], 4
      %s26 = int_to_ptr.vmem [resolvable:$true] %s25
      %31 = dma.hbm_to_vmem [thread:$0]  %s3, 2048, %s26, [#allocation3], 128, 128, 8
    $region17: #{mlp_forward.1} parent=1 // pred_fallthru
      _
    // Predicated region
    $region18: #{mlp_forward.1} parent=1 // pred_check
      _
    $region19: #{mlp_forward.1} parent=1 // pred_check_branch
      %33 = sbr.rel (0) target = $region21
    $region20: #{mlp_forward.1} parent=1 // pred_region
      _
    $region21: #{mlp_forward.1} parent=1 // pred_fallthru
      _
    // Predicated region
    $region22: #{mlp_forward.1} parent=1 // pred_check
      _
    $region23: #{mlp_forward.1} parent=1 // pred_check_branch
      %35 = sbr.rel (0) target = $region25
    $region24: #{mlp_forward.1} parent=1 // pred_region
      %s37 = ssub.s32 2048, 2048
      %38 = vsyncadd [#allocation5], %s37
      %s39 = sshll.u32 [#allocation4], 4
      %s40 = int_to_ptr.vmem [resolvable:$true] %s39
      %45 = dma.hbm_to_vmem [thread:$0]  %s5, 2048, %s40, [#allocation5], 128, 128, 8
    $region25: #{mlp_forward.1} parent=1 // pred_fallthru
      _
    // Predicated region
    $region26: #{mlp_forward.1} parent=1 // pred_check
      _
    $region27: #{mlp_forward.1} parent=1 // pred_check_branch
      %47 = sbr.rel (0) target = $region29
    $region28: #{mlp_forward.1} parent=1 // pred_region
      _
    $region29: #{mlp_forward.1} parent=1 // pred_fallthru
      _
    // Predicated region
    $region30: #{mlp_forward.1} parent=1 // pred_check
      _
    $region31: #{mlp_forward.1} parent=1 // pred_check_branch
      %49 = sbr.rel (0) target = $region33
    $region32: #{mlp_forward.1} parent=1 // pred_region
      %50 = dma.done [#allocation3], 2048
    $region33: #{mlp_forward.1} parent=1 // pred_fallthru
      _
    // Predicated region
    $region34: #{mlp_forward.1} parent=1 // pred_check
      _
    $region35: #{mlp_forward.1} parent=1 // pred_check_branch
      %52 = sbr.rel (0) target = $region37
    $region36: #{mlp_forward.1} parent=1 // pred_region
      %53 = dma.done [#allocation5], 2048
    $region37: #{mlp_forward.1} parent=1 // pred_fallthru
      _
    %v54 = vld [vmem:[%s0] sm:$0xff]
    %v55 = vld [vmem:[%s1] sm:$0x1]
    %57 = vset.pattern.permute.xlu0 0
    %58 = vperm.xlu0 %57, %v54
    %v59 = vpop.permute.xlu0 %58
    %v61 = vlaneseq
    %v62 = vshrl.u32 %v61, 7
    %v63 = vsub.s32 0, %v62
    %v64 = vrot.slane %v55, %v63
    %v65 = vmul.f32 %v59, %v64
    %v66 = vld [vmem:[%s2] sm:$0x1]
    %v68 = vlaneseq
    %v69 = vshrl.u32 %v68, 7
    %v70 = vsub.s32 0, %v69
    %v71 = vrot.slane %v66, %v70
    %v73 = vadd.f32 %v65, %v71
    %v74 = vld [vmem:[%s1 + $0x1] sm:$0x1]
    %75 = vset.pattern.permute.xlu0 1
    %76 = vperm.xlu0 %75, %v54
    %v77 = vpop.permute.xlu0 %76
    %v79 = vlaneseq
    %v80 = vshrl.u32 %v79, 7
    %v81 = vsub.s32 0, %v80
    %v82 = vrot.slane %v74, %v81
    %v83 = vmul.f32 %v77, %v82
    %v84 = vadd.f32 %v73, %v83
    %v85 = vld [vmem:[%s1 + $0x2] sm:$0x1]
    %86 = vset.pattern.permute.xlu0 2
    %87 = vperm.xlu0 %86, %v54
    %v88 = vpop.permute.xlu0 %87
    %v90 = vlaneseq
    %v91 = vshrl.u32 %v90, 7
    %v92 = vsub.s32 0, %v91
    %v93 = vrot.slane %v85, %v92
    %v94 = vmul.f32 %v88, %v93
    %v95 = vadd.f32 %v84, %v94
    %v96 = vld [vmem:[%s1 + $0x3] sm:$0x1]
    %97 = vset.pattern.permute.xlu0 3
    %98 = vperm.xlu0 %97, %v54
    %v99 = vpop.permute.xlu0 %98
    %v101 = vlaneseq
    %v102 = vshrl.u32 %v101, 7
    %v103 = vsub.s32 0, %v102
    %v104 = vrot.slane %v96, %v103
    %v105 = vmul.f32 %v99, %v104
    %v106 = vadd.f32 %v95, %v105
    %v107 = vmax.f32 %v106, 0.0
    %v108 = vld [vmem:[#allocation2] sm:$0xff]
    %v109 = vld [vmem:[#allocation2 + $0x8] sm:$0xff]
    %v110 = vld [vmem:[#allocation2 + $0x10] sm:$0xff]
    %v111 = vld [vmem:[#allocation2 + $0x18] sm:$0xff]
    %v112 = vld [vmem:[#allocation2 + $0x20] sm:$0xff]
    %v113 = vld [vmem:[#allocation2 + $0x28] sm:$0xff]
    %v114 = vld [vmem:[#allocation2 + $0x30] sm:$0xff]
    %v115 = vld [vmem:[#allocation2 + $0x38] sm:$0xff]
    %v116 = vld [vmem:[#allocation2 + $0x40] sm:$0xff]
    %v117 = vld [vmem:[#allocation2 + $0x48] sm:$0xff]
    %v118 = vld [vmem:[#allocation2 + $0x50] sm:$0xff]
    %v119 = vld [vmem:[#allocation2 + $0x58] sm:$0xff]
    %v120 = vld [vmem:[#allocation2 + $0x60] sm:$0xff]
    %v121 = vld [vmem:[#allocation2 + $0x68] sm:$0xff]
    %v122 = vld [vmem:[#allocation2 + $0x70] sm:$0xff]
    %v123 = vld [vmem:[#allocation2 + $0x78] sm:$0xff]
    %v124 = vld [vmem:[%s4] sm:$0x1]
    %v126 = vlaneseq
    %v127 = vshrl.u32 %v126, 7
    %v128 = vsub.s32 0, %v127
    %v129 = vrot.slane %v124, %v128
    %131 = vmatprep.subr.mxu0 0.0
    %132 = vmatpush1.msra.mxu0 %v108
    %133 = vmatprep.subr.mxu0 0.0
    %134 = vmatpush1.msra.mxu0 %v109
    %135 = vmatprep.subr.mxu0 0.0
    %136 = vmatpush1.msra.mxu0 %v110
    %137 = vmatprep.subr.mxu0 0.0
    %138 = vmatpush1.msra.mxu0 %v111
    %139 = vmatprep.subr.mxu0 0.0
    %140 = vmatpush1.msra.mxu0 %v112
    %141 = vmatprep.subr.mxu0 0.0
    %142 = vmatpush1.msra.mxu0 %v113
    %143 = vmatprep.subr.mxu0 0.0
    %144 = vmatpush1.msra.mxu0 %v114
    %145 = vmatprep.subr.mxu0 0.0
    %146 = vmatpush1.msra.mxu0 %v115
    %147 = vmatprep.subr.mxu0 0.0
    %148 = vmatpush1.msra.mxu0 %v116
    %149 = vmatprep.subr.mxu0 0.0
    %150 = vmatpush1.msra.mxu0 %v117
    %151 = vmatprep.subr.mxu0 0.0
    %152 = vmatpush1.msra.mxu0 %v118
    %153 = vmatprep.subr.mxu0 0.0
    %154 = vmatpush1.msra.mxu0 %v119
    %155 = vmatprep.subr.mxu0 0.0
    %156 = vmatpush1.msra.mxu0 %v120
    %157 = vmatprep.subr.mxu0 0.0
    %158 = vmatpush1.msra.mxu0 %v121
    %159 = vmatprep.subr.mxu0 0.0
    %160 = vmatpush1.msra.mxu0 %v122
    %161 = vmatprep.subr.mxu0 0.0
    %162 = vmatpush1.msra.mxu0 %v123
    %163 = vmatprep.subr.mxu0 0.0
    %164 = vmatpush1.msra.mxu0 0.0
    %165 = vmatprep.subr.mxu0 0.0
    %166 = vmatpush1.msra.mxu0 0.0
    %167 = vmatprep.subr.mxu0 0.0
    %168 = vmatpush1.msra.mxu0 0.0
    %169 = vmatprep.subr.mxu0 0.0
    %170 = vmatpush1.msra.mxu0 0.0
    %171 = vmatprep.subr.mxu0 0.0
    %172 = vmatpush1.msra.mxu0 0.0
    %173 = vmatprep.subr.mxu0 0.0
    %174 = vmatpush1.msra.mxu0 0.0
    %175 = vmatprep.subr.mxu0 0.0
    %176 = vmatpush1.msra.mxu0 0.0
    %177 = vmatprep.subr.mxu0 0.0
    %178 = vmatpush1.msra.mxu0 0.0
    %179 = vmatprep.subr.mxu0 0.0
    %180 = vmatpush1.msra.mxu0 0.0
    %181 = vmatprep.subr.mxu0 0.0
    %182 = vmatpush1.msra.mxu0 0.0
    %183 = vmatprep.subr.mxu0 0.0
    %184 = vmatpush1.msra.mxu0 0.0
    %185 = vmatprep.subr.mxu0 0.0
    %186 = vmatpush1.msra.mxu0 0.0
    %187 = vmatprep.subr.mxu0 0.0
    %188 = vmatpush1.msra.mxu0 0.0
    %189 = vmatprep.subr.mxu0 0.0
    %190 = vmatpush1.msra.mxu0 0.0
    %191 = vmatprep.subr.mxu0 0.0
    %192 = vmatpush1.msra.mxu0 0.0
    %193 = vmatprep.subr.mxu0 0.0
    %194 = vmatpush1.msra.mxu0 0.0
    %195 = vmatprep.mubr.f32.mxu0 0.0
    %196 = vmatmul.mubr.f32.gmra.mrb[0].mxu0 %v107
    %v197 = vpop.f32.mrb[0].mxu0
    %v198 = vadd.f32 %v129, %v197
    %v199 = vpop.f32.mrb[0].mxu0
    %200 = vdwg.mxu0
    %v201 = vmax.f32 %v198, 0.0
    %v202 = vld [vmem:[#allocation4] sm:$0xff]
    %v203 = vld [vmem:[#allocation4 + $0x8] sm:$0xff]
    %v204 = vld [vmem:[#allocation4 + $0x10] sm:$0xff]
    %v205 = vld [vmem:[#allocation4 + $0x18] sm:$0xff]
    %v206 = vld [vmem:[#allocation4 + $0x20] sm:$0xff]
    %v207 = vld [vmem:[#allocation4 + $0x28] sm:$0xff]
    %v208 = vld [vmem:[#allocation4 + $0x30] sm:$0xff]
    %v209 = vld [vmem:[#allocation4 + $0x38] sm:$0xff]
    %v210 = vld [vmem:[#allocation4 + $0x40] sm:$0xff]
    %v211 = vld [vmem:[#allocation4 + $0x48] sm:$0xff]
    %v212 = vld [vmem:[#allocation4 + $0x50] sm:$0xff]
    %v213 = vld [vmem:[#allocation4 + $0x58] sm:$0xff]
    %v214 = vld [vmem:[#allocation4 + $0x60] sm:$0xff]
    %v215 = vld [vmem:[#allocation4 + $0x68] sm:$0xff]
    %v216 = vld [vmem:[#allocation4 + $0x70] sm:$0xff]
    %v217 = vld [vmem:[#allocation4 + $0x78] sm:$0xff]
    %v218 = vld [vmem:[%s6] sm:$0x1]
    %v220 = vlaneseq
    %v221 = vshrl.u32 %v220, 7
    %v222 = vsub.s32 0, %v221
    %v223 = vrot.slane %v218, %v222
    %225 = vmatprep.subr.mxu0 0.0
    %226 = vmatpush1.msra.mxu0 %v202
    %227 = vmatprep.subr.mxu0 0.0
    %228 = vmatpush1.msra.mxu0 %v203
    %229 = vmatprep.subr.mxu0 0.0
    %230 = vmatpush1.msra.mxu0 %v204
    %231 = vmatprep.subr.mxu0 0.0
    %232 = vmatpush1.msra.mxu0 %v205
    %233 = vmatprep.subr.mxu0 0.0
    %234 = vmatpush1.msra.mxu0 %v206
    %235 = vmatprep.subr.mxu0 0.0
    %236 = vmatpush1.msra.mxu0 %v207
    %237 = vmatprep.subr.mxu0 0.0
    %238 = vmatpush1.msra.mxu0 %v208
    %239 = vmatprep.subr.mxu0 0.0
    %240 = vmatpush1.msra.mxu0 %v209
    %241 = vmatprep.subr.mxu0 0.0
    %242 = vmatpush1.msra.mxu0 %v210
    %243 = vmatprep.subr.mxu0 0.0
    %244 = vmatpush1.msra.mxu0 %v211
    %245 = vmatprep.subr.mxu0 0.0
    %246 = vmatpush1.msra.mxu0 %v212
    %247 = vmatprep.subr.mxu0 0.0
    %248 = vmatpush1.msra.mxu0 %v213
    %249 = vmatprep.subr.mxu0 0.0
    %250 = vmatpush1.msra.mxu0 %v214
    %251 = vmatprep.subr.mxu0 0.0
    %252 = vmatpush1.msra.mxu0 %v215
    %253 = vmatprep.subr.mxu0 0.0
    %254 = vmatpush1.msra.mxu0 %v216
    %255 = vmatprep.subr.mxu0 0.0
    %256 = vmatpush1.msra.mxu0 %v217
    %257 = vmatprep.subr.mxu0 0.0
    %258 = vmatpush1.msra.mxu0 0.0
    %259 = vmatprep.subr.mxu0 0.0
    %260 = vmatpush1.msra.mxu0 0.0
    %261 = vmatprep.subr.mxu0 0.0
    %262 = vmatpush1.msra.mxu0 0.0
    %263 = vmatprep.subr.mxu0 0.0
    %264 = vmatpush1.msra.mxu0 0.0
    %265 = vmatprep.subr.mxu0 0.0
    %266 = vmatpush1.msra.mxu0 0.0
    %267 = vmatprep.subr.mxu0 0.0
    %268 = vmatpush1.msra.mxu0 0.0
    %269 = vmatprep.subr.mxu0 0.0
    %270 = vmatpush1.msra.mxu0 0.0
    %271 = vmatprep.subr.mxu0 0.0
    %272 = vmatpush1.msra.mxu0 0.0
    %273 = vmatprep.subr.mxu0 0.0
    %274 = vmatpush1.msra.mxu0 0.0
    %275 = vmatprep.subr.mxu0 0.0
    %276 = vmatpush1.msra.mxu0 0.0
    %277 = vmatprep.subr.mxu0 0.0
    %278 = vmatpush1.msra.mxu0 0.0
    %279 = vmatprep.subr.mxu0 0.0
    %280 = vmatpush1.msra.mxu0 0.0
    %281 = vmatprep.subr.mxu0 0.0
    %282 = vmatpush1.msra.mxu0 0.0
    %283 = vmatprep.subr.mxu0 0.0
    %284 = vmatpush1.msra.mxu0 0.0
    %285 = vmatprep.subr.mxu0 0.0
    %286 = vmatpush1.msra.mxu0 0.0
    %287 = vmatprep.subr.mxu0 0.0
    %288 = vmatpush1.msra.mxu0 0.0
    %289 = vmatprep.mubr.f32.mxu0 0.0
    %290 = vmatmul.mubr.f32.gmra.mrb[0].mxu0 %v201
    %v291 = vpop.f32.mrb[0].mxu0
    %v292 = vadd.f32 %v223, %v291
    %v293 = vpop.f32.mrb[0].mxu0
    %294 = vdwg.mxu0
    %vm295 = vcmask 15360
    %296 = vst.msk [vmem:[%s7] sm:$0xff] %vm295, %v292
    // Predicated region
    $region38: #{mlp_forward.1} parent=1 // pred_check
      _
    $region39: #{mlp_forward.1} parent=1 // pred_check_branch
      %298 = sbr.rel (0) target = $region41
    $region40: #{mlp_forward.1} parent=1 // pred_region
      _
    $region41: #{mlp_forward.1} parent=1 // pred_fallthru
      _
    // Predicated region
    $region42: #{mlp_forward.1} parent=1 // pred_check
      _
    $region43: #{mlp_forward.1} parent=1 // pred_check_branch
      %300 = sbr.rel (0) target = $region45
    $region44: #{mlp_forward.1} parent=1 // pred_region
      _
    $region45: #{mlp_forward.1} parent=1 // pred_fallthru
      _
    %301 = vsyncpa [#allocation3], 1
    %302 = vsyncpa [#allocation5], 1

</llo_original>
